<compile_context>
chip_gen: v5e
topology: v5e:2x2
jax: 0.10.0
libtpu: 0.0.40
codegen_flags: <defaults>
</compile_context>

<pallas_src>
import math

import jax
import jax.numpy as jnp
from jax.experimental import pallas as pl
from jax.experimental.pallas import tpu as pltpu

_LANES = 128
_BLOCK_BUDGET_BYTES = 4 * 1024 * 1024  # per-block cap; ~16 MiB total w/ 2x2 buffers


def _identity_kernel(x_ref, o_ref):
    # FusionNet2.forward(x, expert_feature) == x (identity copy of one tile).
    o_ref[...] = x_ref[...]


def fusion_net2_forward(x, expert_feature, params=None):
    """Pallas implementation of FusionNet2.forward(x, expert_feature) -> x."""
    del expert_feature  # unused by the reference forward
    del params          # unused by the reference forward

    orig_shape = x.shape

    # ---- present a lane-dense 2-D slab to the kernel (pure reshape) --------
    total = x.size
    if total % _LANES == 0:
        rows, cols = total // _LANES, _LANES          # unmasked full-lane stores
    else:
        cols = orig_shape[-1] if x.ndim >= 1 else 1   # small/odd case: keep last dim
        rows = total // cols
    x2 = x.reshape(rows, cols)

    # ---- row-tile selection: largest multiple-of-8 tile under the budget ---
    bytes_per_row = cols * x2.dtype.itemsize
    if rows * bytes_per_row <= _BLOCK_BUDGET_BYTES:
        tr = rows                                     # single block == full array
    else:
        tr = max(8, (_BLOCK_BUDGET_BYTES // bytes_per_row) // 8 * 8)
    grid = (pl.cdiv(rows, tr),)                       # cdiv: no dropped tail rows

    out2 = pl.pallas_call(
        _identity_kernel,
        out_shape=jax.ShapeDtypeStruct((rows, cols), x2.dtype),
        grid=grid,
        in_specs=[pl.BlockSpec((tr, cols), lambda i: (i, 0))],
        out_specs=pl.BlockSpec((tr, cols), lambda i: (i, 0)),
        input_output_aliases={0: 0},                  # output aliases input buffer
        compiler_params=pltpu.CompilerParams(
            dimension_semantics=("parallel",)),
    )(x2)

    return out2.reshape(orig_shape)


def init_fusion_net2_params(input_dim, key):
    """TEST-ONLY: mirrors FusionNet2.__init__ shapes.

    The reference forward never reads these parameters, so this helper is NOT
    called on the hot path (avoids dead HBM allocations / transfers).
    """
    hidden_dim_1 = math.floor(input_dim * 1.5)
    hidden_dim_2 = math.floor(hidden_dim_1 * 1.5)

    def linear(key, fan_in, fan_out):
        kw, kb = jax.random.split(key)
        bound = 1.0 / math.sqrt(fan_in)
        w = jax.random.uniform(kw, (fan_out, fan_in), jnp.float32, -bound, bound)
        b = jax.random.uniform(kb, (fan_out,), jnp.float32, -bound, bound)
        return {"weight": w, "bias": b}

    k1, k2, k3, k4, k5 = jax.random.split(key, 5)
    return {
        "fc1": linear(k1, input_dim, hidden_dim_1),
        "fc2": linear(k2, hidden_dim_1, hidden_dim_2),
        "fc3": linear(k3, hidden_dim_2, hidden_dim_1),
        "fc4": linear(k4, hidden_dim_1, input_dim),
        "fc5": linear(k5, input_dim, 2),
        "bn": {
            "weight": jnp.ones((hidden_dim_2,), jnp.float32),
            "bias": jnp.zeros((hidden_dim_2,), jnp.float32),
            "running_mean": jnp.zeros((hidden_dim_2,), jnp.float32),
            "running_var": jnp.ones((hidden_dim_2,), jnp.float32),
        },
    }


if __name__ == "__main__":
    key = jax.random.PRNGKey(0)
    kx, ke = jax.random.split(key, 2)

    batch = 2
    input_dim = 32
    expert_dim = 8

    x = jax.random.normal(kx, (batch, input_dim), dtype=jnp.float32)
    expert_feature = jax.random.normal(ke, (batch, expert_dim), dtype=jnp.float32)

    # Host-side reference copy (robust against any buffer aliasing/donation).
    x_host = jax.device_get(x)

    out = fusion_net2_forward(x, expert_feature)
    out = jax.block_until_ready(out)

    assert out.shape == tuple(x_host.shape) and out.dtype == x_host.dtype
    assert bool(jnp.array_equal(out, jnp.asarray(x_host)))
    print("KERNEL_OK")
</pallas_src>

<mosaic_0001>
module attributes {stable_mosaic.version = 11 : i64} {
  func.func @_identity_kernel(%arg0: i32, %arg1: memref<2x32xf32, #tpu.memory_space<vmem>>, %arg2: memref<2x32xf32, #tpu.memory_space<vmem>>) attributes {dimension_semantics = [#tpu.dimension_semantics<parallel>], iteration_bounds = array<i64: 1>, scalar_prefetch = 0 : i64, scratch_operands = 0 : i64, tpu.core_type = #tpu.core_type<tc>, window_params = [{transform_indices = @transform_0, window_bounds = array<i64: 2, 32>}, {transform_indices = @transform_1, window_bounds = array<i64: 2, 32>}]} {
    %c0 = arith.constant 0 : index
    %c0_0 = arith.constant 0 : index
    %0 = vector.load %arg1[%c0, %c0_0] : memref<2x32xf32, #tpu.memory_space<vmem>>, vector<2x32xf32>
    %c0_1 = arith.constant 0 : index
    %c0_2 = arith.constant 0 : index
    %1 = vector.load %arg2[%c0_1, %c0_2] : memref<2x32xf32, #tpu.memory_space<vmem>>, vector<2x32xf32>
    tpu.vector_store %arg2[%c0_1, %c0_2], %0 {strides = array<i32>} : memref<2x32xf32, #tpu.memory_space<vmem>>, vector<2x32xf32>,
    return
  }
  func.func @transform_0(%arg0: i32) -> (i32, i32) {
    %c0_i32 = arith.constant 0 : i32
    %c0_i32_0 = arith.constant 0 : i32
    return %arg0, %c0_i32 : i32, i32
  }
  func.func @transform_1(%arg0: i32) -> (i32, i32) {
    %c0_i32 = arith.constant 0 : i32
    %c0_i32_0 = arith.constant 0 : i32
    return %arg0, %c0_i32 : i32, i32
  }
}

</mosaic_0001>

<llo_original>
// kernel: tpu_custom_call.1
$region0: #{tpu_custom_call.1}
  #allocation0 [shape = 'u32[]', space=smem, size = 0x4, offset = 0x4, fixed_abs, tag = 'smem constant byte address 0x4 - core index']
  #allocation1 [shape = 'u32[72,128]{1,0:T(1,128)}', space=vmem, size = 0x9000, scoped, tag = 'internal scratch']
  %s0 = inlined_call_operand.hbm [shape: f32[2,32], index: 0, kind: input, shape index: {}, may-alias: {0,1}]
  %s1 = inlined_call_operand.hbm [shape: f32[2,32], index: 1, kind: output, shape index: {}, may-alias: {0,1}]
  %s2 = sld [smem:[#allocation0]]
  $region18: #{tpu_custom_call.1} parent=0
    _
  %s4 = ssub.s32 1, %s2
  %s5 = scalar_select 0, %s4, %s2
  $region1: #{tpu_custom_call.1} parent=0
    #allocation2 [shape = 'u8[1024]{0}', space=vmem, size = 0x400, scoped, tag = 'input window, operand 0, single buffered']
    #allocation3 [shape = 's32[1]{0}', space=sflag, size = 0x4, scoped, tag = 'scoped memory for tpu_custom_call.1']
    #allocation4 [shape = 's32[1]{0}', space=sflag, size = 0x4, scoped, tag = 'scoped memory for tpu_custom_call.1']
    #allocation5 [shape = 'u8[1024]{0}', space=vmem, size = 0x400, scoped, tag = 'output window, operand 0, single buffered']
    %6 = vsyncpa [#allocation3], 0
    %7 = vsyncpa [#allocation4], 0
    // Predicated region
    $region2: #{tpu_custom_call.1} parent=1 // pred_check
      _
    $region3: #{tpu_custom_call.1} parent=1 // pred_check_branch
      %9 = sbr.rel (0) target = $region5
    $region4: #{tpu_custom_call.1} parent=1 // pred_region
      %11 = vsyncadd [#allocation3], 0
      %s13 = sshll.u32 %s0, 4
      %s14 = int_to_ptr.hbm [resolvable:$true] %s13
      %s15 = sshll.u32 [#allocation2], 4
      %s16 = int_to_ptr.vmem [resolvable:$true] %s15
      %18 = dma.hbm_to_vmem [thread:$0]  %s14, 32, %s16, [#allocation3]
    $region5: #{tpu_custom_call.1} parent=1 // pred_fallthru
      _
    // Predicated region
    $region6: #{tpu_custom_call.1} parent=1 // pred_check
      _
    $region7: #{tpu_custom_call.1} parent=1 // pred_check_branch
      %20 = sbr.rel (0) target = $region9
    $region8: #{tpu_custom_call.1} parent=1 // pred_region
      %22 = dma.done [#allocation3], 32
    $region9: #{tpu_custom_call.1} parent=1 // pred_fallthru
      _
    %v23 = vld [vmem:[#allocation2] sm:$0x3]
    %vm24 = vcmask 254976
    %25 = vst.msk [vmem:[#allocation5] sm:$0x3] %vm24, %v23
    // Predicated region
    $region10: #{tpu_custom_call.1} parent=1 // pred_check
      _
    $region11: #{tpu_custom_call.1} parent=1 // pred_check_branch
      %27 = sbr.rel (0) target = $region13
    $region12: #{tpu_custom_call.1} parent=1 // pred_region
      %29 = vsyncadd [#allocation4], 0
      %s31 = sshll.u32 [#allocation5], 4
      %s32 = int_to_ptr.vmem [resolvable:$true] %s31
      %s33 = sshll.u32 %s1, 4
      %s34 = int_to_ptr.hbm [resolvable:$true] %s33
      %36 = dma.vmem_to_hbm [thread:$0]  %s32, 32, %s34, [#allocation4]
    $region13: #{tpu_custom_call.1} parent=1 // pred_fallthru
      _
    // Predicated region
    $region14: #{tpu_custom_call.1} parent=1 // pred_check
      _
    $region15: #{tpu_custom_call.1} parent=1 // pred_check_branch
      %38 = sbr.rel (0) target = $region17
    $region16: #{tpu_custom_call.1} parent=1 // pred_region
      %40 = dma.done [#allocation4], 32
    $region17: #{tpu_custom_call.1} parent=1 // pred_fallthru
      _
    %41 = vsyncpa [#allocation3], 1
    %42 = vsyncpa [#allocation4], 1

</llo_original>
